<compile_context>
chip_gen: v7x
topology: tpu7x:2x2x1
jax: 0.10.0
libtpu: 0.0.40
codegen_flags: <defaults>
</compile_context>

<pallas_src>
import jax
import jax.numpy as jnp
from jax.experimental import pallas as pl
from jax.experimental.pallas import tpu as pltpu


def dqn_kernel(xt_ref, w12t_ref, w3_ref, ot_ref):
    # y^T = W3 @ relu(W12T @ x^T), f32 accumulation on the MXU.
    xt = xt_ref[...]                                                       # (n_input, TB)
    h = jnp.dot(w12t_ref[...], xt, preferred_element_type=jnp.float32)    # (64, TB)
    h = jnp.maximum(h, 0.0)
    yt = jnp.dot(w3_ref[...], h, preferred_element_type=jnp.float32)      # (n_output, TB)
    ot_ref[...] = yt.astype(ot_ref.dtype)


def prepare_params(w1, w2, w3):
    """One-time parameter prep (outside the per-step hot path).

    w1: (64, n_input), w2: (64, 64), w3: (n_output, 64) in PyTorch layout.
    Returns (w12t, w3) with w12t = W2 @ W1 (64, n_input); w3 is used as-is.
    Fold is valid because the module applies NO activation after layer 1.
    """
    w12t = w2 @ w1          # (64, n_input)
    return w12t, w3


def _round_up(v, m):
    return -(-v // m) * m


def dqn_forward(x, w12t, w3, *, max_batch_tile=4096):
    """x: (B, n_input) f32; w12t: (64, n_input); w3: (n_output, 64).
    Returns (B, n_output) f32, matching DQN.forward semantics."""
    B, n_input = x.shape
    hidden_n = w12t.shape[0]
    n_output = w3.shape[0]

    # Lane axis (batch) must be a multiple of 128 for unmasked, dense stores.
    b_pad = _round_up(max(B, 1), 128)

    # Tile selection: one big tile when it fits; 2-way split at large batch so
    # v7x's two TensorCores each take half (extra step is negligible elsewhere).
    if b_pad >= 2048:
        tb = _round_up(pl.cdiv(b_pad, 2), 128)
    else:
        tb = b_pad
    tb = min(tb, max_batch_tile)
    b_pad = _round_up(b_pad, tb)

    # Batch-on-lanes activations.
    xt = jnp.transpose(x)                                   # (n_input, B)
    if b_pad != B:
        xt = jnp.pad(xt, ((0, 0), (0, b_pad - B)))

    grid = (b_pad // tb,)
    flops = 2 * b_pad * (n_input * hidden_n + hidden_n * n_output)
    bytes_accessed = 4 * (b_pad * n_input + w12t.size + w3.size + b_pad * n_output)

    yt = pl.pallas_call(
        dqn_kernel,
        out_shape=jax.ShapeDtypeStruct((n_output, b_pad), jnp.float32),
        grid=grid,
        in_specs=[
            pl.BlockSpec((n_input, tb), lambda i: (0, i)),       # batch-tiled activations
            pl.BlockSpec((hidden_n, n_input), lambda i: (0, 0)),  # weights VMEM-resident
            pl.BlockSpec((n_output, hidden_n), lambda i: (0, 0)),
        ],
        out_specs=pl.BlockSpec((n_output, tb), lambda i: (0, i)),
        compiler_params=pltpu.CompilerParams(dimension_semantics=("parallel",)),
        cost_estimate=pl.CostEstimate(
            flops=flops, transcendentals=0, bytes_accessed=bytes_accessed),
    )(xt, w12t, w3)

    y = jnp.transpose(yt)                                    # (b_pad, n_output)
    return y[:B] if b_pad != B else y


def _init_linear_weight(key, out_features, in_features):
    # PyTorch nn.Linear default init: U(-1/sqrt(fan_in), 1/sqrt(fan_in)).
    bound = 1.0 / jnp.sqrt(jnp.float32(in_features))
    return jax.random.uniform(key, (out_features, in_features),
                              dtype=jnp.float32, minval=-bound, maxval=bound)


if __name__ == "__main__":
    # MountainCar: n_input = 2 (observation), n_output = 3 (actions), hidden = 64.
    n_input, hidden_n, n_output = 2, 64, 3
    batch = 8

    key = jax.random.PRNGKey(0)
    kx, k1, k2, k3 = jax.random.split(key, 4)

    x = jax.random.normal(kx, (batch, n_input), dtype=jnp.float32)
    w1 = _init_linear_weight(k1, hidden_n, n_input)   # hidden_layer_1.weight
    w2 = _init_linear_weight(k2, hidden_n, hidden_n)  # hidden_layer_2.weight
    w3 = _init_linear_weight(k3, n_output, hidden_n)  # output_layer.weight

    # One-time parameter prep (W1/W2 fold into transposed convention).
    w12t, w3p = prepare_params(w1, w2, w3)

    out = dqn_forward(x, w12t, w3p)
    out = jax.block_until_ready(out)

    # Pure-JAX reference against the ORIGINAL (unfolded) PyTorch semantics:
    #   y = relu((x @ W1^T) @ W2^T) @ W3^T
    ref = jnp.maximum(x @ w1.T @ w2.T, 0.0) @ w3.T
    assert out.shape == (batch, n_output)
    assert jnp.allclose(out, ref, atol=1e-5, rtol=1e-5), "mismatch vs reference"

    print("KERNEL_OK")
</pallas_src>

<mosaic_0001>
module attributes {stable_mosaic.version = 11 : i64} {
  func.func @dqn_kernel(%arg0: i32, %arg1: memref<2x128xf32, #tpu.memory_space<vmem>>, %arg2: memref<64x2xf32, #tpu.memory_space<vmem>>, %arg3: memref<3x64xf32, #tpu.memory_space<vmem>>, %arg4: memref<3x128xf32, #tpu.memory_space<vmem>>) attributes {dimension_semantics = [#tpu.dimension_semantics<parallel>], iteration_bounds = array<i64: 1>, scalar_prefetch = 0 : i64, scratch_operands = 0 : i64, tpu.core_type = #tpu.core_type<tc>, window_params = [{transform_indices = @transform_0, window_bounds = array<i64: 2, 128>}, {pipeline_mode = #tpu.pipeline_mode<synchronous>, transform_indices = @transform_1, window_bounds = array<i64: 64, 2>}, {pipeline_mode = #tpu.pipeline_mode<synchronous>, transform_indices = @transform_2, window_bounds = array<i64: 3, 64>}, {transform_indices = @transform_3, window_bounds = array<i64: 3, 128>}]} {
    %c0 = arith.constant 0 : index
    %c0_0 = arith.constant 0 : index
    %0 = vector.load %arg1[%c0, %c0_0] : memref<2x128xf32, #tpu.memory_space<vmem>>, vector<2x128xf32>
    %c0_1 = arith.constant 0 : index
    %c0_2 = arith.constant 0 : index
    %1 = vector.load %arg2[%c0_1, %c0_2] : memref<64x2xf32, #tpu.memory_space<vmem>>, vector<64x2xf32>
    %cst = arith.constant dense<0.000000e+00> : vector<64x128xf32>
    %2 = tpu.matmul %1, %0, %cst {dimension_numbers = #tpu.dot_dimension_numbers<[1], [0], [0], [1], [0, 0, 1, 1], [], []>} : vector<64x2xf32>, vector<2x128xf32>, vector<64x128xf32> -> vector<64x128xf32>
    %cst_3 = arith.constant 0.000000e+00 : f32
    %3 = vector.broadcast %cst_3 : f32 to vector<64x128xf32>
    %4 = arith.maximumf %2, %3 : vector<64x128xf32>
    %c0_4 = arith.constant 0 : index
    %c0_5 = arith.constant 0 : index
    %5 = vector.load %arg3[%c0_4, %c0_5] : memref<3x64xf32, #tpu.memory_space<vmem>>, vector<3x64xf32>
    %cst_6 = arith.constant dense<0.000000e+00> : vector<3x128xf32>
    %6 = tpu.matmul %5, %4, %cst_6 {dimension_numbers = #tpu.dot_dimension_numbers<[1], [0], [0], [1], [0, 0, 1, 1], [], []>} : vector<3x64xf32>, vector<64x128xf32>, vector<3x128xf32> -> vector<3x128xf32>
    %c0_7 = arith.constant 0 : index
    %c0_8 = arith.constant 0 : index
    %7 = vector.load %arg4[%c0_7, %c0_8] : memref<3x128xf32, #tpu.memory_space<vmem>>, vector<3x128xf32>
    tpu.vector_store %arg4[%c0_7, %c0_8], %6 {strides = array<i32>} : memref<3x128xf32, #tpu.memory_space<vmem>>, vector<3x128xf32>,
    return
  }
  func.func @transform_0(%arg0: i32) -> (i32, i32) {
    %c0_i32 = arith.constant 0 : i32
    %c0_i32_0 = arith.constant 0 : i32
    return %c0_i32, %arg0 : i32, i32
  }
  func.func @transform_1(%arg0: i32) -> (i32, i32) {
    %c0_i32 = arith.constant 0 : i32
    %c0_i32_0 = arith.constant 0 : i32
    %c0_i32_1 = arith.constant 0 : i32
    return %c0_i32, %c0_i32_0 : i32, i32
  }
  func.func @transform_2(%arg0: i32) -> (i32, i32) {
    %c0_i32 = arith.constant 0 : i32
    %c0_i32_0 = arith.constant 0 : i32
    %c0_i32_1 = arith.constant 0 : i32
    return %c0_i32, %c0_i32_0 : i32, i32
  }
  func.func @transform_3(%arg0: i32) -> (i32, i32) {
    %c0_i32 = arith.constant 0 : i32
    %c0_i32_0 = arith.constant 0 : i32
    return %c0_i32, %arg0 : i32, i32
  }
}

</mosaic_0001>

<llo_original>
// kernel: tpu_custom_call.1
$region0: #{tpu_custom_call.1}
  #allocation0 [shape = 'u32[]', space=smem, size = 0x4, offset = 0x4, fixed_abs, tag = 'smem constant byte address 0x4 - core index']
  #allocation1 [shape = 'u32[144,128]{1,0:T(1,128)}', space=vmem, size = 0x12000, scoped, tag = 'internal scratch']
  %s0 = inlined_call_operand.vmem [shape: f32[2,128], index: 0, kind: input, shape index: {}]
  %s1 = inlined_call_operand.vmem [shape: f32[64,2], index: 1, kind: input, shape index: {}]
  %s2 = inlined_call_operand.vmem [shape: f32[3,64], index: 2, kind: input, shape index: {}]
  %s3 = inlined_call_operand.hbm [shape: f32[3,128], index: 3, kind: output, shape index: {}]
  %s4 = sld [smem:[#allocation0]]
  $region22: #{tpu_custom_call.1} parent=0
    _
  %s6 = ssub.s32 1, %s4
  %s7 = scalar_select 0, %s6, %s4
  $region1: #{tpu_custom_call.1} parent=0
    #allocation2 [shape = 'u8[2048]{0}', space=vmem, size = 0x800, scoped, tag = 'output window, operand 0, single buffered']
    #allocation3 [shape = 's32[1]{0}', space=sflag, size = 0x4, scoped, tag = 'scoped memory for tpu_custom_call.1']
    %8 = vsyncpa [#allocation3], 0
    // Predicated region
    $region2: #{tpu_custom_call.1} parent=1 // pred_check
      _
    $region3: #{tpu_custom_call.1} parent=1 // pred_check_branch
      %10 = sbr.rel (0) target = $region5
    $region4: #{tpu_custom_call.1} parent=1 // pred_region
      _
    $region5: #{tpu_custom_call.1} parent=1 // pred_fallthru
      _
    // Predicated region
    $region6: #{tpu_custom_call.1} parent=1 // pred_check
      _
    $region7: #{tpu_custom_call.1} parent=1 // pred_check_branch
      %12 = sbr.rel (0) target = $region9
    $region8: #{tpu_custom_call.1} parent=1 // pred_region
      _
    $region9: #{tpu_custom_call.1} parent=1 // pred_fallthru
      _
    // Predicated region
    $region10: #{tpu_custom_call.1} parent=1 // pred_check
      _
    $region11: #{tpu_custom_call.1} parent=1 // pred_check_branch
      %14 = sbr.rel (0) target = $region13
    $region12: #{tpu_custom_call.1} parent=1 // pred_region
      _
    $region13: #{tpu_custom_call.1} parent=1 // pred_fallthru
      _
    %v15 = vld [vmem:[%s0] sm:$0x3]
    %v16 = vld [vmem:[%s1] sm:$0xff]
    %v17 = vld [vmem:[%s1 + $0x8] sm:$0xff]
    %v18 = vld [vmem:[%s1 + $0x10] sm:$0xff]
    %v19 = vld [vmem:[%s1 + $0x18] sm:$0xff]
    %v20 = vld [vmem:[%s1 + $0x20] sm:$0xff]
    %v21 = vld [vmem:[%s1 + $0x28] sm:$0xff]
    %v22 = vld [vmem:[%s1 + $0x30] sm:$0xff]
    %v23 = vld [vmem:[%s1 + $0x38] sm:$0xff]
    %vm24 = vcmask 15360
    %v26 = vsel %vm24, %v16, 0
    %v29 = vsel %vm24, %v17, 0
    %v32 = vsel %vm24, %v18, 0
    %v35 = vsel %vm24, %v19, 0
    %v38 = vsel %vm24, %v20, 0
    %v41 = vsel %vm24, %v21, 0
    %v44 = vsel %vm24, %v22, 0
    %v47 = vsel %vm24, %v23, 0
    %vm49 = vcmask 1041408
    %v51 = vsel %vm49, %v15, 0
    %53 = vmatprep.subr.mxu0 0.0
    %54 = vmatpush1.msra.mxu0 %v51
    %55 = vmatprep.subr.mxu0 0.0
    %56 = vmatpush1.msra.mxu0 0.0
    %57 = vmatprep.subr.mxu0 0.0
    %58 = vmatpush1.msra.mxu0 0.0
    %59 = vmatprep.subr.mxu0 0.0
    %60 = vmatpush1.msra.mxu0 0.0
    %61 = vmatprep.subr.mxu0 0.0
    %62 = vmatpush1.msra.mxu0 0.0
    %63 = vmatprep.subr.mxu0 0.0
    %64 = vmatpush1.msra.mxu0 0.0
    %65 = vmatprep.subr.mxu0 0.0
    %66 = vmatpush1.msra.mxu0 0.0
    %67 = vmatprep.subr.mxu0 0.0
    %68 = vmatpush1.msra.mxu0 0.0
    %69 = vmatprep.subr.mxu0 0.0
    %70 = vmatpush1.msra.mxu0 0.0
    %71 = vmatprep.subr.mxu0 0.0
    %72 = vmatpush1.msra.mxu0 0.0
    %73 = vmatprep.subr.mxu0 0.0
    %74 = vmatpush1.msra.mxu0 0.0
    %75 = vmatprep.subr.mxu0 0.0
    %76 = vmatpush1.msra.mxu0 0.0
    %77 = vmatprep.subr.mxu0 0.0
    %78 = vmatpush1.msra.mxu0 0.0
    %79 = vmatprep.subr.mxu0 0.0
    %80 = vmatpush1.msra.mxu0 0.0
    %81 = vmatprep.subr.mxu0 0.0
    %82 = vmatpush1.msra.mxu0 0.0
    %83 = vmatprep.subr.mxu0 0.0
    %84 = vmatpush1.msra.mxu0 0.0
    %85 = vmatprep.subr.mxu0 0.0
    %86 = vmatpush1.msra.mxu0 0.0
    %87 = vmatprep.subr.mxu0 0.0
    %88 = vmatpush1.msra.mxu0 0.0
    %89 = vmatprep.subr.mxu0 0.0
    %90 = vmatpush1.msra.mxu0 0.0
    %91 = vmatprep.subr.mxu0 0.0
    %92 = vmatpush1.msra.mxu0 0.0
    %93 = vmatprep.subr.mxu0 0.0
    %94 = vmatpush1.msra.mxu0 0.0
    %95 = vmatprep.subr.mxu0 0.0
    %96 = vmatpush1.msra.mxu0 0.0
    %97 = vmatprep.subr.mxu0 0.0
    %98 = vmatpush1.msra.mxu0 0.0
    %99 = vmatprep.subr.mxu0 0.0
    %100 = vmatpush1.msra.mxu0 0.0
    %101 = vmatprep.subr.mxu0 0.0
    %102 = vmatpush1.msra.mxu0 0.0
    %103 = vmatprep.subr.mxu0 0.0
    %104 = vmatpush1.msra.mxu0 0.0
    %105 = vmatprep.subr.mxu0 0.0
    %106 = vmatpush1.msra.mxu0 0.0
    %107 = vmatprep.subr.mxu0 0.0
    %108 = vmatpush1.msra.mxu0 0.0
    %109 = vmatprep.subr.mxu0 0.0
    %110 = vmatpush1.msra.mxu0 0.0
    %111 = vmatprep.subr.mxu0 0.0
    %112 = vmatpush1.msra.mxu0 0.0
    %113 = vmatprep.subr.mxu0 0.0
    %114 = vmatpush1.msra.mxu0 0.0
    %115 = vmatprep.subr.mxu0 0.0
    %116 = vmatpush1.msra.mxu0 0.0
    %117 = vmatprep.mubr.f32.mxu0 0.0
    %118 = vmatmul.mubr.f32.gmra.mrb[0].mxu0 %v26
    %v119 = vpop.f32.mrb[0].mxu0
    %v120 = vadd.f32 0.0, %v119
    %v121 = vpop.f32.mrb[0].mxu0
    %122 = vmatprep.mubr.f32.mxu0 0.0
    %123 = vmatmul.mubr.f32.gmra.mrb[0].mxu0 %v29
    %v124 = vpop.f32.mrb[0].mxu0
    %v125 = vadd.f32 0.0, %v124
    %v126 = vpop.f32.mrb[0].mxu0
    %127 = vmatprep.mubr.f32.mxu0 0.0
    %128 = vmatmul.mubr.f32.gmra.mrb[0].mxu0 %v32
    %v129 = vpop.f32.mrb[0].mxu0
    %v130 = vadd.f32 0.0, %v129
    %v131 = vpop.f32.mrb[0].mxu0
    %132 = vmatprep.mubr.f32.mxu0 0.0
    %133 = vmatmul.mubr.f32.gmra.mrb[0].mxu0 %v35
    %v134 = vpop.f32.mrb[0].mxu0
    %v135 = vadd.f32 0.0, %v134
    %v136 = vpop.f32.mrb[0].mxu0
    %137 = vmatprep.mubr.f32.mxu0 0.0
    %138 = vmatmul.mubr.f32.gmra.mrb[0].mxu0 %v38
    %v139 = vpop.f32.mrb[0].mxu0
    %v140 = vadd.f32 0.0, %v139
    %v141 = vpop.f32.mrb[0].mxu0
    %142 = vmatprep.mubr.f32.mxu0 0.0
    %143 = vmatmul.mubr.f32.gmra.mrb[0].mxu0 %v41
    %v144 = vpop.f32.mrb[0].mxu0
    %v145 = vadd.f32 0.0, %v144
    %v146 = vpop.f32.mrb[0].mxu0
    %147 = vmatprep.mubr.f32.mxu0 0.0
    %148 = vmatmul.mubr.f32.gmra.mrb[0].mxu0 %v44
    %v149 = vpop.f32.mrb[0].mxu0
    %v150 = vadd.f32 0.0, %v149
    %v151 = vpop.f32.mrb[0].mxu0
    %152 = vmatprep.mubr.f32.mxu0 0.0
    %153 = vmatmul.mubr.f32.gmra.mrb[0].mxu0 %v47
    %v154 = vpop.f32.mrb[0].mxu0
    %v155 = vadd.f32 0.0, %v154
    %v156 = vpop.f32.mrb[0].mxu0
    %157 = vdwg.mxu0
    %v158 = vmax.f32 %v120, 0.0
    %v159 = vmax.f32 %v125, 0.0
    %v160 = vmax.f32 %v130, 0.0
    %v161 = vmax.f32 %v135, 0.0
    %v162 = vmax.f32 %v140, 0.0
    %v163 = vmax.f32 %v145, 0.0
    %v164 = vmax.f32 %v150, 0.0
    %v165 = vmax.f32 %v155, 0.0
    %v166 = vld [vmem:[%s2] sm:$0x7]
    %vm167 = vcmask 523264
    %v169 = vsel %vm167, %v166, 0
    %171 = vmatprep.subr.mxu0 0.0
    %172 = vmatpush1.msra.mxu0 %v158
    %173 = vmatprep.subr.mxu0 0.0
    %174 = vmatpush1.msra.mxu0 %v159
    %175 = vmatprep.subr.mxu0 0.0
    %176 = vmatpush1.msra.mxu0 %v160
    %177 = vmatprep.subr.mxu0 0.0
    %178 = vmatpush1.msra.mxu0 %v161
    %179 = vmatprep.subr.mxu0 0.0
    %180 = vmatpush1.msra.mxu0 %v162
    %181 = vmatprep.subr.mxu0 0.0
    %182 = vmatpush1.msra.mxu0 %v163
    %183 = vmatprep.subr.mxu0 0.0
    %184 = vmatpush1.msra.mxu0 %v164
    %185 = vmatprep.subr.mxu0 0.0
    %186 = vmatpush1.msra.mxu0 %v165
    %187 = vmatprep.subr.mxu0 0.0
    %188 = vmatpush1.msra.mxu0 0.0
    %189 = vmatprep.subr.mxu0 0.0
    %190 = vmatpush1.msra.mxu0 0.0
    %191 = vmatprep.subr.mxu0 0.0
    %192 = vmatpush1.msra.mxu0 0.0
    %193 = vmatprep.subr.mxu0 0.0
    %194 = vmatpush1.msra.mxu0 0.0
    %195 = vmatprep.subr.mxu0 0.0
    %196 = vmatpush1.msra.mxu0 0.0
    %197 = vmatprep.subr.mxu0 0.0
    %198 = vmatpush1.msra.mxu0 0.0
    %199 = vmatprep.subr.mxu0 0.0
    %200 = vmatpush1.msra.mxu0 0.0
    %201 = vmatprep.subr.mxu0 0.0
    %202 = vmatpush1.msra.mxu0 0.0
    %203 = vmatprep.subr.mxu0 0.0
    %204 = vmatpush1.msra.mxu0 0.0
    %205 = vmatprep.subr.mxu0 0.0
    %206 = vmatpush1.msra.mxu0 0.0
    %207 = vmatprep.subr.mxu0 0.0
    %208 = vmatpush1.msra.mxu0 0.0
    %209 = vmatprep.subr.mxu0 0.0
    %210 = vmatpush1.msra.mxu0 0.0
    %211 = vmatprep.subr.mxu0 0.0
    %212 = vmatpush1.msra.mxu0 0.0
    %213 = vmatprep.subr.mxu0 0.0
    %214 = vmatpush1.msra.mxu0 0.0
    %215 = vmatprep.subr.mxu0 0.0
    %216 = vmatpush1.msra.mxu0 0.0
    %217 = vmatprep.subr.mxu0 0.0
    %218 = vmatpush1.msra.mxu0 0.0
    %219 = vmatprep.subr.mxu0 0.0
    %220 = vmatpush1.msra.mxu0 0.0
    %221 = vmatprep.subr.mxu0 0.0
    %222 = vmatpush1.msra.mxu0 0.0
    %223 = vmatprep.subr.mxu0 0.0
    %224 = vmatpush1.msra.mxu0 0.0
    %225 = vmatprep.subr.mxu0 0.0
    %226 = vmatpush1.msra.mxu0 0.0
    %227 = vmatprep.subr.mxu0 0.0
    %228 = vmatpush1.msra.mxu0 0.0
    %229 = vmatprep.subr.mxu0 0.0
    %230 = vmatpush1.msra.mxu0 0.0
    %231 = vmatprep.subr.mxu0 0.0
    %232 = vmatpush1.msra.mxu0 0.0
    %233 = vmatprep.subr.mxu0 0.0
    %234 = vmatpush1.msra.mxu0 0.0
    %235 = vmatprep.mubr.f32.mxu0 0.0
    %236 = vmatmul.mubr.f32.gmra.mrb[0].mxu0 %v169
    %v237 = vpop.f32.mrb[0].mxu0
    %v238 = vadd.f32 0.0, %v237
    %v239 = vpop.f32.mrb[0].mxu0
    %240 = vdwg.mxu0
    %241 = vst [vmem:[#allocation2] sm:$0x7] %v238
    // Predicated region
    $region14: #{tpu_custom_call.1} parent=1 // pred_check
      _
    $region15: #{tpu_custom_call.1} parent=1 // pred_check_branch
      %243 = sbr.rel (0) target = $region17
    $region16: #{tpu_custom_call.1} parent=1 // pred_region
      %s245 = ssub.s32 64, 64
      %246 = vsyncadd [#allocation3], %s245
      %s248 = sshll.u32 [#allocation2], 4
      %s249 = int_to_ptr.vmem [resolvable:$true] %s248
      %251 = dma.vmem_to_hbm [thread:$0]  %s249, 64, %s3, [#allocation3]
    $region17: #{tpu_custom_call.1} parent=1 // pred_fallthru
      _
    // Predicated region
    $region18: #{tpu_custom_call.1} parent=1 // pred_check
      _
    $region19: #{tpu_custom_call.1} parent=1 // pred_check_branch
      %253 = sbr.rel (0) target = $region21
    $region20: #{tpu_custom_call.1} parent=1 // pred_region
      %254 = dma.done [#allocation3], 64
    $region21: #{tpu_custom_call.1} parent=1 // pred_fallthru
      _
    %255 = vsyncpa [#allocation3], 1

</llo_original>
